<compile_context>
chip_gen: v5e
topology: v5e:2x2
jax: 0.10.0
libtpu: 0.0.40
codegen_flags: <defaults>
</compile_context>

<pallas_src>
import functools

import jax
import jax.numpy as jnp
from jax.experimental import pallas as pl
from jax.experimental.pallas import tpu as pltpu


LN_EPS = 1e-5
_VMEM_BUDGET = 12 * 1024 * 1024   # stay well under v5e's 16 MiB default scoped VMEM
_MAX_ROWS = 4096                  # rows/grid-step cap; 512-1024+ keeps DMA near roofline


def _patch_merging_pad(x):
    """(B, H, W, C) -> (B, ceil(H/2), ceil(W/2), 4C). Reference-path only."""
    B, H, W, C = x.shape
    if (H % 2 != 0) or (W % 2 != 0):
        x = jnp.pad(x, ((0, 0), (0, H % 2), (0, W % 2), (0, 0)))
    x0 = x[:, 0::2, 0::2, :]
    x1 = x[:, 1::2, 0::2, :]
    x2 = x[:, 0::2, 1::2, :]
    x3 = x[:, 1::2, 1::2, :]
    return jnp.concatenate([x0, x1, x2, x3], axis=-1)


def _fused_kernel(he_ref, ho_ref, whe_ref, who_ref, bias_ref, o_ref, *, eps):
    # he_ref / ho_ref: (TBH, Wo, 2C)   even-h / odd-h parity slabs
    # whe_ref/who_ref: (2C, Dout)      gamma-folded weight halves (matmul dtype)
    # bias_ref:        (1, Dout)       beta @ W (f32)
    # o_ref:           (TBH*Wo, Dout)
    tbh, wo, c2 = he_ref.shape
    rows = tbh * wo
    inv_4c = 1.0 / float(2 * c2)      # 4C == 2 * (2C)

    # NOTE: this reshape is a layout no-op when Wo % 8 == 0; otherwise Mosaic
    # inserts a relayout (correct, slightly slower).
    he = he_ref[...].astype(jnp.float32).reshape(rows, c2)
    ho = ho_ref[...].astype(jnp.float32).reshape(rows, c2)

    # LayerNorm statistics over the full 4C channels (split across the 2 slabs).
    mean = (jnp.sum(he, axis=-1, keepdims=True)
            + jnp.sum(ho, axis=-1, keepdims=True)) * inv_4c
    ce = he - mean
    co = ho - mean
    var = (jnp.sum(ce * ce, axis=-1, keepdims=True)
           + jnp.sum(co * co, axis=-1, keepdims=True)) * inv_4c
    inv = jax.lax.rsqrt(var + eps)

    mdt = whe_ref.dtype
    xe = (ce * inv).astype(mdt)
    xo = (co * inv).astype(mdt)

    acc = jnp.dot(xe, whe_ref[...], preferred_element_type=jnp.float32)
    acc = acc + jnp.dot(xo, who_ref[...], preferred_element_type=jnp.float32)
    acc = acc + bias_ref[...].astype(jnp.float32)
    o_ref[...] = acc.astype(o_ref.dtype)


def _choose_tbh(bho, wo, c2, dout, in_bytes, out_bytes, weight_bytes):
    """Largest divisor of bho whose tile fits the VMEM budget (double-buffered)."""
    # Partial blocks need an 8-aligned sublane dim unless the block is the full array.
    legal = [t for t in range(1, bho + 1)
             if bho % t == 0 and (t == bho or (t * wo) % 8 == 0)]

    def foot(t):
        rows = t * wo
        return (2 * 2 * rows * c2 * in_bytes      # two parity input streams, x2 buffers
                + 2 * rows * dout * out_bytes     # output, x2 buffers
                + weight_bytes)

    fitting = [t for t in legal if foot(t) <= _VMEM_BUDGET and t * wo <= _MAX_ROWS]
    if fitting:
        return max(fitting, key=lambda t: t * wo)
    # Fallback: smallest legal tile (only hit for extreme Wo*C; could also tile Wo).
    return min(legal, key=lambda t: t * wo)


def patch_merging_2d(x, gamma, beta, weight, *, matmul_dtype=jnp.bfloat16, eps=LN_EPS):
    """PatchMerging2D forward.

    x:      (B, H, W, C)
    gamma:  (4C,)   LayerNorm weight
    beta:   (4C,)   LayerNorm bias
    weight: (4C, out_dim)  reduction weight (transpose of torch Linear.weight)
    returns (B, ceil(H/2), ceil(W/2), out_dim)
    """
    B, H, W, C = x.shape
    if (H % 2 != 0) or (W % 2 != 0):          # torch-style zero pad on odd spatial dims
        x = jnp.pad(x, ((0, 0), (0, H % 2), (0, W % 2), (0, 0)))
    Hp, Wp = x.shape[1], x.shape[2]
    Ho, Wo = Hp // 2, Wp // 2
    C2 = 2 * C
    Dout = weight.shape[1]

    # Free contiguous reshape: (B, Hp, Wp, C) -> (B*Ho, 2, Wo, 2C).
    # dim1 = h parity; last dim layout per pixel = [even-w channels | odd-w channels].
    xr = x.reshape(B * Ho, 2, Wo, C2)

    # Fold LayerNorm affine into the matmul: W' = gamma*W, bias = beta @ W.
    w32 = weight.astype(jnp.float32)
    wp = gamma.astype(jnp.float32)[:, None] * w32
    bias = (beta.astype(jnp.float32) @ w32).reshape(1, Dout)
    # Reorder W' rows to match the parity-slab channel layouts:
    #   even-h slab channels = [x0 | x2], odd-h slab channels = [x1 | x3]
    w_he = jnp.concatenate([wp[0:C], wp[2 * C:3 * C]], axis=0).astype(matmul_dtype)
    w_ho = jnp.concatenate([wp[C:2 * C], wp[3 * C:4 * C]], axis=0).astype(matmul_dtype)

    in_bytes = jnp.dtype(x.dtype).itemsize
    out_bytes = jnp.dtype(x.dtype).itemsize
    weight_bytes = 2 * (2 * C2 * Dout * jnp.dtype(matmul_dtype).itemsize) + 2 * Dout * 4

    BHo = B * Ho
    N = BHo * Wo
    TBH = _choose_tbh(BHo, Wo, C2, Dout, in_bytes, out_bytes, weight_bytes)
    rows = TBH * Wo
    grid = (BHo // TBH,)

    out2d = pl.pallas_call(
        functools.partial(_fused_kernel, eps=eps),
        out_shape=jax.ShapeDtypeStruct((N, Dout), x.dtype),
        grid=grid,
        in_specs=[
            # even-h rows: pin (squeeze) the parity dim to 0
            pl.BlockSpec((TBH, None, Wo, C2), lambda i: (i, 0, 0, 0)),
            # odd-h rows: pin (squeeze) the parity dim to 1
            pl.BlockSpec((TBH, None, Wo, C2), lambda i: (i, 1, 0, 0)),
            pl.BlockSpec((C2, Dout), lambda i: (0, 0)),
            pl.BlockSpec((C2, Dout), lambda i: (0, 0)),
            pl.BlockSpec((1, Dout), lambda i: (0, 0)),
        ],
        out_specs=pl.BlockSpec((rows, Dout), lambda i: (i, 0)),
        compiler_params=pltpu.CompilerParams(
            dimension_semantics=("parallel",),
        ),
    )(xr, xr, w_he, w_ho, bias)

    return out2d.reshape(B, Ho, Wo, Dout)


def _reference(x, gamma, beta, weight):
    xm = _patch_merging_pad(x).astype(jnp.float32)
    mean = jnp.mean(xm, axis=-1, keepdims=True)
    var = jnp.mean((xm - mean) ** 2, axis=-1, keepdims=True)
    xn = (xm - mean) / jnp.sqrt(var + LN_EPS)
    xn = xn * gamma + beta
    return xn @ weight.astype(jnp.float32)


if __name__ == "__main__":
    B, H, W, C = 2, 16, 16, 4          # dim = C = 4, out_dim defaults to 2*dim = 8
    dim = C
    out_dim = 2 * dim

    key = jax.random.PRNGKey(0)
    kx, kw, kg, kb = jax.random.split(key, 4)
    x = jax.random.normal(kx, (B, H, W, C), dtype=jnp.float32)
    # reduction: Linear(4*dim, 2*dim, bias=False); weight stored as (4*dim, 2*dim)
    weight = jax.random.normal(kw, (4 * dim, out_dim), dtype=jnp.float32) * 0.1
    gamma = 1.0 + 0.1 * jax.random.normal(kg, (4 * dim,), dtype=jnp.float32)
    beta = 0.1 * jax.random.normal(kb, (4 * dim,), dtype=jnp.float32)

    ref = _reference(x, gamma, beta, weight)

    # f32 MXU operands: tight tolerance vs the f32 reference.
    out_f32 = jax.block_until_ready(
        patch_merging_2d(x, gamma, beta, weight, matmul_dtype=jnp.float32))
    assert out_f32.shape == (B, H // 2, W // 2, out_dim), out_f32.shape
    err = float(jnp.max(jnp.abs(out_f32 - ref)))
    assert jnp.allclose(out_f32, ref, atol=1e-4, rtol=1e-4), err

    # Default bf16 MXU operands (v6e/v7x fast path): looser tolerance.
    out_bf16 = jax.block_until_ready(patch_merging_2d(x, gamma, beta, weight))
    err_bf16 = float(jnp.max(jnp.abs(out_bf16 - ref)))
    assert jnp.allclose(out_bf16, ref, atol=3e-2, rtol=3e-2), err_bf16

    # Odd H exercises the torch-style zero-pad path (padded rows never produced
    # as outputs since padding happens before the 2x2 merge).
    x_odd = jax.random.normal(kx, (1, 7, 16, C), dtype=jnp.float32)
    ref_odd = _reference(x_odd, gamma, beta, weight)
    out_odd = jax.block_until_ready(
        patch_merging_2d(x_odd, gamma, beta, weight, matmul_dtype=jnp.float32))
    assert out_odd.shape == (1, 4, 8, out_dim), out_odd.shape
    err_odd = float(jnp.max(jnp.abs(out_odd - ref_odd)))
    assert jnp.allclose(out_odd, ref_odd, atol=1e-4, rtol=1e-4), err_odd

    print("KERNEL_OK")
</pallas_src>

<mosaic_0001>
module attributes {stable_mosaic.version = 11 : i64} {
  func.func @_fused_kernel(%arg0: i32, %arg1: memref<16x1x8x8xf32, #tpu.memory_space<vmem>>, %arg2: memref<16x1x8x8xf32, #tpu.memory_space<vmem>>, %arg3: memref<8x8xf32, #tpu.memory_space<vmem>>, %arg4: memref<8x8xf32, #tpu.memory_space<vmem>>, %arg5: memref<1x8xf32, #tpu.memory_space<vmem>>, %arg6: memref<128x8xf32, #tpu.memory_space<vmem>>) attributes {dimension_semantics = [#tpu.dimension_semantics<parallel>], iteration_bounds = array<i64: 1>, scalar_prefetch = 0 : i64, scratch_operands = 0 : i64, tpu.core_type = #tpu.core_type<tc>, window_params = [{transform_indices = @transform_0, window_bounds = array<i64: 16, 1, 8, 8>}, {transform_indices = @transform_1, window_bounds = array<i64: 16, 1, 8, 8>}, {pipeline_mode = #tpu.pipeline_mode<synchronous>, transform_indices = @transform_2, window_bounds = array<i64: 8, 8>}, {pipeline_mode = #tpu.pipeline_mode<synchronous>, transform_indices = @transform_3, window_bounds = array<i64: 8, 8>}, {pipeline_mode = #tpu.pipeline_mode<synchronous>, transform_indices = @transform_4, window_bounds = array<i64: 1, 8>}, {transform_indices = @transform_5, window_bounds = array<i64: 128, 8>}]} {
    %c0 = arith.constant 0 : index
    %c0_0 = arith.constant 0 : index
    %c0_1 = arith.constant 0 : index
    %c0_2 = arith.constant 0 : index
    %0 = vector.load %arg1[%c0, %c0_0, %c0_1, %c0_2] : memref<16x1x8x8xf32, #tpu.memory_space<vmem>>, vector<16x1x8x8xf32>
    %1 = vector.shape_cast %0 : vector<16x1x8x8xf32> to vector<16x8x8xf32>
    %2 = vector.shape_cast %1 : vector<16x8x8xf32> to vector<128x8xf32>
    %c0_3 = arith.constant 0 : index
    %c0_4 = arith.constant 0 : index
    %c0_5 = arith.constant 0 : index
    %c0_6 = arith.constant 0 : index
    %3 = vector.load %arg2[%c0_3, %c0_4, %c0_5, %c0_6] : memref<16x1x8x8xf32, #tpu.memory_space<vmem>>, vector<16x1x8x8xf32>
    %4 = vector.shape_cast %3 : vector<16x1x8x8xf32> to vector<16x8x8xf32>
    %5 = vector.shape_cast %4 : vector<16x8x8xf32> to vector<128x8xf32>
    %cst = arith.constant dense<0.000000e+00> : vector<128xf32>
    %6 = vector.multi_reduction <add>, %2, %cst [1] : vector<128x8xf32> to vector<128xf32>
    %7 = vector.shape_cast %6 : vector<128xf32> to vector<128x1xf32>
    %cst_7 = arith.constant dense<0.000000e+00> : vector<128xf32>
    %8 = vector.multi_reduction <add>, %5, %cst_7 [1] : vector<128x8xf32> to vector<128xf32>
    %9 = vector.shape_cast %8 : vector<128xf32> to vector<128x1xf32>
    %10 = arith.addf %7, %9 : vector<128x1xf32>
    %cst_8 = arith.constant 6.250000e-02 : f32
    %11 = vector.broadcast %cst_8 : f32 to vector<128x1xf32>
    %12 = arith.mulf %10, %11 : vector<128x1xf32>
    %13 = vector.broadcast %12 : vector<128x1xf32> to vector<128x8xf32>
    %14 = arith.subf %2, %13 : vector<128x8xf32>
    %15 = vector.broadcast %12 : vector<128x1xf32> to vector<128x8xf32>
    %16 = arith.subf %5, %15 : vector<128x8xf32>
    %17 = arith.mulf %14, %14 : vector<128x8xf32>
    %cst_9 = arith.constant dense<0.000000e+00> : vector<128xf32>
    %18 = vector.multi_reduction <add>, %17, %cst_9 [1] : vector<128x8xf32> to vector<128xf32>
    %19 = vector.shape_cast %18 : vector<128xf32> to vector<128x1xf32>
    %20 = arith.mulf %16, %16 : vector<128x8xf32>
    %cst_10 = arith.constant dense<0.000000e+00> : vector<128xf32>
    %21 = vector.multi_reduction <add>, %20, %cst_10 [1] : vector<128x8xf32> to vector<128xf32>
    %22 = vector.shape_cast %21 : vector<128xf32> to vector<128x1xf32>
    %23 = arith.addf %19, %22 : vector<128x1xf32>
    %cst_11 = arith.constant 6.250000e-02 : f32
    %24 = vector.broadcast %cst_11 : f32 to vector<128x1xf32>
    %25 = arith.mulf %23, %24 : vector<128x1xf32>
    %cst_12 = arith.constant 9.99999974E-6 : f32
    %26 = vector.broadcast %cst_12 : f32 to vector<128x1xf32>
    %27 = arith.addf %25, %26 : vector<128x1xf32>
    %28 = math.rsqrt %27 : vector<128x1xf32>
    %29 = vector.broadcast %28 : vector<128x1xf32> to vector<128x8xf32>
    %30 = arith.mulf %14, %29 : vector<128x8xf32>
    %31 = vector.broadcast %28 : vector<128x1xf32> to vector<128x8xf32>
    %32 = arith.mulf %16, %31 : vector<128x8xf32>
    %c0_13 = arith.constant 0 : index
    %c0_14 = arith.constant 0 : index
    %33 = vector.load %arg3[%c0_13, %c0_14] : memref<8x8xf32, #tpu.memory_space<vmem>>, vector<8x8xf32>
    %cst_15 = arith.constant dense<0.000000e+00> : vector<128x8xf32>
    %34 = tpu.matmul %30, %33, %cst_15 {dimension_numbers = #tpu.dot_dimension_numbers<[1], [0], [0], [1], [0, 0, 1, 1], [], []>} : vector<128x8xf32>, vector<8x8xf32>, vector<128x8xf32> -> vector<128x8xf32>
    %c0_16 = arith.constant 0 : index
    %c0_17 = arith.constant 0 : index
    %35 = vector.load %arg4[%c0_16, %c0_17] : memref<8x8xf32, #tpu.memory_space<vmem>>, vector<8x8xf32>
    %cst_18 = arith.constant dense<0.000000e+00> : vector<128x8xf32>
    %36 = tpu.matmul %32, %35, %cst_18 {dimension_numbers = #tpu.dot_dimension_numbers<[1], [0], [0], [1], [0, 0, 1, 1], [], []>} : vector<128x8xf32>, vector<8x8xf32>, vector<128x8xf32> -> vector<128x8xf32>
    %37 = arith.addf %34, %36 : vector<128x8xf32>
    %c0_19 = arith.constant 0 : index
    %c0_20 = arith.constant 0 : index
    %38 = vector.load %arg5[%c0_19, %c0_20] : memref<1x8xf32, #tpu.memory_space<vmem>>, vector<1x8xf32>
    %39 = vector.broadcast %38 : vector<1x8xf32> to vector<128x8xf32>
    %40 = arith.addf %37, %39 : vector<128x8xf32>
    %c0_21 = arith.constant 0 : index
    %c0_22 = arith.constant 0 : index
    %41 = vector.load %arg6[%c0_21, %c0_22] : memref<128x8xf32, #tpu.memory_space<vmem>>, vector<128x8xf32>
    tpu.vector_store %arg6[%c0_21, %c0_22], %40 {strides = array<i32>} : memref<128x8xf32, #tpu.memory_space<vmem>>, vector<128x8xf32>,
    return
  }
  func.func @transform_0(%arg0: i32) -> (i32, i32, i32, i32) {
    %c0_i32 = arith.constant 0 : i32
    %c0_i32_0 = arith.constant 0 : i32
    %c0_i32_1 = arith.constant 0 : i32
    %c0_i32_2 = arith.constant 0 : i32
    return %arg0, %c0_i32, %c0_i32_0, %c0_i32_1 : i32, i32, i32, i32
  }
  func.func @transform_1(%arg0: i32) -> (i32, i32, i32, i32) {
    %c1_i32 = arith.constant 1 : i32
    %c0_i32 = arith.constant 0 : i32
    %c0_i32_0 = arith.constant 0 : i32
    %c0_i32_1 = arith.constant 0 : i32
    return %arg0, %c1_i32, %c0_i32, %c0_i32_0 : i32, i32, i32, i32
  }
  func.func @transform_2(%arg0: i32) -> (i32, i32) {
    %c0_i32 = arith.constant 0 : i32
    %c0_i32_0 = arith.constant 0 : i32
    %c0_i32_1 = arith.constant 0 : i32
    return %c0_i32, %c0_i32_0 : i32, i32
  }
  func.func @transform_3(%arg0: i32) -> (i32, i32) {
    %c0_i32 = arith.constant 0 : i32
    %c0_i32_0 = arith.constant 0 : i32
    %c0_i32_1 = arith.constant 0 : i32
    return %c0_i32, %c0_i32_0 : i32, i32
  }
  func.func @transform_4(%arg0: i32) -> (i32, i32) {
    %c0_i32 = arith.constant 0 : i32
    %c0_i32_0 = arith.constant 0 : i32
    %c0_i32_1 = arith.constant 0 : i32
    return %c0_i32, %c0_i32_0 : i32, i32
  }
  func.func @transform_5(%arg0: i32) -> (i32, i32) {
    %c0_i32 = arith.constant 0 : i32
    %c0_i32_0 = arith.constant 0 : i32
    return %arg0, %c0_i32 : i32, i32
  }
}

</mosaic_0001>

<llo_original>
// kernel: tpu_custom_call.1
$region0: #{tpu_custom_call.1}
  #allocation0 [shape = 'u32[]', space=smem, size = 0x4, offset = 0x4, fixed_abs, tag = 'smem constant byte address 0x4 - core index']
  #allocation1 [shape = 'u32[72,128]{1,0:T(1,128)}', space=vmem, size = 0x9000, scoped, tag = 'internal scratch']
  %s0 = inlined_call_operand.vmem [shape: f32[16,2,8,8], index: 0, kind: input, shape index: {}]
  %s1 = inlined_call_operand.vmem [shape: f32[16,2,8,8], index: 1, kind: input, shape index: {}]
  %s2 = inlined_call_operand.vmem [shape: f32[8,8], index: 2, kind: input, shape index: {}]
  %s3 = inlined_call_operand.vmem [shape: f32[8,8], index: 3, kind: input, shape index: {}]
  %s4 = inlined_call_operand.vmem [shape: f32[1,8], index: 4, kind: input, shape index: {}]
  %s5 = inlined_call_operand.vmem [shape: f32[128,8], index: 5, kind: output, shape index: {}]
  %s6 = sld [smem:[#allocation0]]
  $region106: #{tpu_custom_call.1} parent=0
    _
  %s8 = ssub.s32 1, %s6
  %s9 = scalar_select 0, %s8, %s6
  $region1: #{tpu_custom_call.1} parent=0
    #allocation2 [shape = 'u8[65536]{0}', space=vmem, size = 0x10000, scoped, tag = 'input window, operand 0, single buffered']
    #allocation3 [shape = 'u8[65536]{0}', space=vmem, size = 0x10000, scoped, tag = 'input window, operand 1, single buffered']
    // Predicated region
    $region2: #{tpu_custom_call.1} parent=1 // pred_check
      _
    $region3: #{tpu_custom_call.1} parent=1 // pred_check_branch
      %11 = sbr.rel (0) target = $region5
    $region4: #{tpu_custom_call.1} parent=1 // pred_region
      // Predicated region
      $region6: #{tpu_custom_call.1} parent=4 // pred_check
        _
      $region7: #{tpu_custom_call.1} parent=4 // pred_check_branch
        %13 = sbr.rel (0) target = $region9
      $region8: #{tpu_custom_call.1} parent=4 // pred_region
        // Predicated region
        $region10: #{tpu_custom_call.1} parent=8 // pred_check
          _
        $region11: #{tpu_custom_call.1} parent=8 // pred_check_branch
          %15 = sbr.rel (0) target = $region13
        $region12: #{tpu_custom_call.1} parent=8 // pred_region
          // Predicated region
          $region25: #{tpu_custom_call.1} parent=12 // pred_check
            _
          $region26: #{tpu_custom_call.1} parent=12 // pred_check_branch
            %61 = sbr.rel (0) target = $region28
          $region27: #{tpu_custom_call.1} parent=12 // pred_region
            loop: start=0, step=1, limit=1
            $region29: #{tpu_custom_call.1} parent=27 // loop_pre_header
              _
            $region30: #{tpu_custom_call.1} parent=27 // loop_header
              %s63 = sphi 0, %s67
              %p64 = scmp.ge.s32.totalorder %s63, 1
              %s68 = sphi %s0, %s0
              %s69 = sphi [#allocation2], [#allocation2]
            $region31: #{tpu_custom_call.1} parent=27 // loop_header_branch
              %66 = sbr.rel (%p64) target = $region35
            $region32: #{tpu_custom_call.1} parent=27 // loop_body
              %v70 = vld [vmem:[%s68] sm:$0xff]
              %71 = vst [vmem:[%s69] sm:$0xff] %v70
              %v72 = vld [vmem:[%s68 + $0x10] sm:$0xff]
              %73 = vst [vmem:[%s69 + $0x8] sm:$0xff] %v72
              %v74 = vld [vmem:[%s68 + $0x20] sm:$0xff]
              %75 = vst [vmem:[%s69 + $0x10] sm:$0xff] %v74
              %v76 = vld [vmem:[%s68 + $0x30] sm:$0xff]
              %77 = vst [vmem:[%s69 + $0x18] sm:$0xff] %v76
              %v78 = vld [vmem:[%s68 + $0x40] sm:$0xff]
              %79 = vst [vmem:[%s69 + $0x20] sm:$0xff] %v78
              %v80 = vld [vmem:[%s68 + $0x50] sm:$0xff]
              %81 = vst [vmem:[%s69 + $0x28] sm:$0xff] %v80
              %v82 = vld [vmem:[%s68 + $0x60] sm:$0xff]
              %83 = vst [vmem:[%s69 + $0x30] sm:$0xff] %v82
              %v84 = vld [vmem:[%s68 + $0x70] sm:$0xff]
              %85 = vst [vmem:[%s69 + $0x38] sm:$0xff] %v84
              %v86 = vld [vmem:[%s68 + $0x80] sm:$0xff]
              %87 = vst [vmem:[%s69 + $0x40] sm:$0xff] %v86
              %v88 = vld [vmem:[%s68 + $0x90] sm:$0xff]
              %89 = vst [vmem:[%s69 + $0x48] sm:$0xff] %v88
              %v90 = vld [vmem:[%s68 + $0xa0] sm:$0xff]
              %91 = vst [vmem:[%s69 + $0x50] sm:$0xff] %v90
              %v92 = vld [vmem:[%s68 + $0xb0] sm:$0xff]
              %93 = vst [vmem:[%s69 + $0x58] sm:$0xff] %v92
              %v94 = vld [vmem:[%s68 + $0xc0] sm:$0xff]
              %95 = vst [vmem:[%s69 + $0x60] sm:$0xff] %v94
              %v96 = vld [vmem:[%s68 + $0xd0] sm:$0xff]
              %97 = vst [vmem:[%s69 + $0x68] sm:$0xff] %v96
              %v98 = vld [vmem:[%s68 + $0xe0] sm:$0xff]
              %99 = vst [vmem:[%s69 + $0x70] sm:$0xff] %v98
              %v100 = vld [vmem:[%s68 + $0xf0] sm:$0xff]
              %101 = vst [vmem:[%s69 + $0x78] sm:$0xff] %v100
            $region33: #{tpu_custom_call.1} parent=27 // loop_footer
              %s67 = sadd.s32 1, %s63
            $region34: #{tpu_custom_call.1} parent=27 // loop_footer_branch
              %62 = sbr.rel target = $region30
            $region35: #{tpu_custom_call.1} parent=27 // loop_exit
              _
          $region28: #{tpu_custom_call.1} parent=12 // pred_fallthru
            _
          // Predicated region
          $region36: #{tpu_custom_call.1} parent=12 // pred_check
            _
          $region37: #{tpu_custom_call.1} parent=12 // pred_check_branch
            %103 = sbr.rel target = $region39
          $region38: #{tpu_custom_call.1} parent=12 // pred_region
            _
          $region39: #{tpu_custom_call.1} parent=12 // pred_fallthru
            _
        $region13: #{tpu_custom_call.1} parent=8 // pred_fallthru
          _
        // Predicated region
        $region14: #{tpu_custom_call.1} parent=8 // pred_check
          _
        $region15: #{tpu_custom_call.1} parent=8 // pred_check_branch
          %17 = sbr.rel target = $region17
        $region16: #{tpu_custom_call.1} parent=8 // pred_region
          %s19 = ssub.s32 256, 1
          loop: start=0, step=1, limit=1
          $region18: #{tpu_custom_call.1} parent=16 // loop_pre_header
            _
          $region19: #{tpu_custom_call.1} parent=16 // loop_header
            %s21 = sphi 0, %s25
            %p22 = scmp.ge.s32.totalorder %s21, 1
            %s26 = sphi %s0, %s0
            %s27 = sphi [#allocation2], [#allocation2]
          $region20: #{tpu_custom_call.1} parent=16 // loop_header_branch
            %24 = sbr.rel (%p22) target = $region24
          $region21: #{tpu_custom_call.1} parent=16 // loop_body
            %v28 = vld [vmem:[%s26] sm:%s19]
            %29 = vst [vmem:[%s27] sm:%s19] %v28
            %v30 = vld [vmem:[%s26 + $0x10] sm:%s19]
            %31 = vst [vmem:[%s27 + $0x8] sm:%s19] %v30
            %v32 = vld [vmem:[%s26 + $0x20] sm:%s19]
            %33 = vst [vmem:[%s27 + $0x10] sm:%s19] %v32
            %v34 = vld [vmem:[%s26 + $0x30] sm:%s19]
            %35 = vst [vmem:[%s27 + $0x18] sm:%s19] %v34
            %v36 = vld [vmem:[%s26 + $0x40] sm:%s19]
            %37 = vst [vmem:[%s27 + $0x20] sm:%s19] %v36
            %v38 = vld [vmem:[%s26 + $0x50] sm:%s19]
            %39 = vst [vmem:[%s27 + $0x28] sm:%s19] %v38
            %v40 = vld [vmem:[%s26 + $0x60] sm:%s19]
            %41 = vst [vmem:[%s27 + $0x30] sm:%s19] %v40
            %v42 = vld [vmem:[%s26 + $0x70] sm:%s19]
            %43 = vst [vmem:[%s27 + $0x38] sm:%s19] %v42
            %v44 = vld [vmem:[%s26 + $0x80] sm:%s19]
            %45 = vst [vmem:[%s27 + $0x40] sm:%s19] %v44
            %v46 = vld [vmem:[%s26 + $0x90] sm:%s19]
            %47 = vst [vmem:[%s27 + $0x48] sm:%s19] %v46
            %v48 = vld [vmem:[%s26 + $0xa0] sm:%s19]
            %49 = vst [vmem:[%s27 + $0x50] sm:%s19] %v48
            %v50 = vld [vmem:[%s26 + $0xb0] sm:%s19]
            %51 = vst [vmem:[%s27 + $0x58] sm:%s19] %v50
            %v52 = vld [vmem:[%s26 + $0xc0] sm:%s19]
            %53 = vst [vmem:[%s27 + $0x60] sm:%s19] %v52
            %v54 = vld [vmem:[%s26 + $0xd0] sm:%s19]
            %55 = vst [vmem:[%s27 + $0x68] sm:%s19] %v54
            %v56 = vld [vmem:[%s26 + $0xe0] sm:%s19]
            %57 = vst [vmem:[%s27 + $0x70] sm:%s19] %v56
            %v58 = vld [vmem:[%s26 + $0xf0] sm:%s19]
            %59 = vst [vmem:[%s27 + $0x78] sm:%s19] %v58
          $region22: #{tpu_custom_call.1} parent=16 // loop_footer
            %s25 = sadd.s32 1, %s21
          $region23: #{tpu_custom_call.1} parent=16 // loop_footer_branch
            %20 = sbr.rel target = $region19
          $region24: #{tpu_custom_call.1} parent=16 // loop_exit
            _
        $region17: #{tpu_custom_call.1} parent=8 // pred_fallthru
          _
      $region9: #{tpu_custom_call.1} parent=4 // pred_fallthru
        _
      %104 = vnop
    $region5: #{tpu_custom_call.1} parent=1 // pred_fallthru
      _
    // Predicated region
    $region40: #{tpu_custom_call.1} parent=1 // pred_check
      _
    $region41: #{tpu_custom_call.1} parent=1 // pred_check_branch
      %106 = sbr.rel (0) target = $region43
    $region42: #{tpu_custom_call.1} parent=1 // pred_region
      %s107 = scalar_lea.vmem %s1, 8
      // Predicated region
      $region44: #{tpu_custom_call.1} parent=42 // pred_check
        _
      $region45: #{tpu_custom_call.1} parent=42 // pred_check_branch
        %109 = sbr.rel (0) target = $region47
      $region46: #{tpu_custom_call.1} parent=42 // pred_region
        // Predicated region
        $region48: #{tpu_custom_call.1} parent=46 // pred_check
          _
        $region49: #{tpu_custom_call.1} parent=46 // pred_check_branch
          %111 = sbr.rel (0) target = $region51
        $region50: #{tpu_custom_call.1} parent=46 // pred_region
          // Predicated region
          $region63: #{tpu_custom_call.1} parent=50 // pred_check
            _
          $region64: #{tpu_custom_call.1} parent=50 // pred_check_branch
            %157 = sbr.rel (0) target = $region66
          $region65: #{tpu_custom_call.1} parent=50 // pred_region
            loop: start=0, step=1, limit=1
            $region67: #{tpu_custom_call.1} parent=65 // loop_pre_header
              _
            $region68: #{tpu_custom_call.1} parent=65 // loop_header
              %s159 = sphi 0, %s163
              %p160 = scmp.ge.s32.totalorder %s159, 1
              %s164 = sphi %s107, %s107
              %s165 = sphi [#allocation3], [#allocation3]
            $region69: #{tpu_custom_call.1} parent=65 // loop_header_branch
              %162 = sbr.rel (%p160) target = $region73
            $region70: #{tpu_custom_call.1} parent=65 // loop_body
              %v166 = vld [vmem:[%s164] sm:$0xff]
              %167 = vst [vmem:[%s165] sm:$0xff] %v166
              %v168 = vld [vmem:[%s164 + $0x10] sm:$0xff]
              %169 = vst [vmem:[%s165 + $0x8] sm:$0xff] %v168
              %v170 = vld [vmem:[%s164 + $0x20] sm:$0xff]
              %171 = vst [vmem:[%s165 + $0x10] sm:$0xff] %v170
              %v172 = vld [vmem:[%s164 + $0x30] sm:$0xff]
              %173 = vst [vmem:[%s165 + $0x18] sm:$0xff] %v172
              %v174 = vld [vmem:[%s164 + $0x40] sm:$0xff]
              %175 = vst [vmem:[%s165 + $0x20] sm:$0xff] %v174
              %v176 = vld [vmem:[%s164 + $0x50] sm:$0xff]
              %177 = vst [vmem:[%s165 + $0x28] sm:$0xff] %v176
              %v178 = vld [vmem:[%s164 + $0x60] sm:$0xff]
              %179 = vst [vmem:[%s165 + $0x30] sm:$0xff] %v178
              %v180 = vld [vmem:[%s164 + $0x70] sm:$0xff]
              %181 = vst [vmem:[%s165 + $0x38] sm:$0xff] %v180
              %v182 = vld [vmem:[%s164 + $0x80] sm:$0xff]
              %183 = vst [vmem:[%s165 + $0x40] sm:$0xff] %v182
              %v184 = vld [vmem:[%s164 + $0x90] sm:$0xff]
              %185 = vst [vmem:[%s165 + $0x48] sm:$0xff] %v184
              %v186 = vld [vmem:[%s164 + $0xa0] sm:$0xff]
              %187 = vst [vmem:[%s165 + $0x50] sm:$0xff] %v186
              %v188 = vld [vmem:[%s164 + $0xb0] sm:$0xff]
              %189 = vst [vmem:[%s165 + $0x58] sm:$0xff] %v188
              %v190 = vld [vmem:[%s164 + $0xc0] sm:$0xff]
              %191 = vst [vmem:[%s165 + $0x60] sm:$0xff] %v190
              %v192 = vld [vmem:[%s164 + $0xd0] sm:$0xff]
              %193 = vst [vmem:[%s165 + $0x68] sm:$0xff] %v192
              %v194 = vld [vmem:[%s164 + $0xe0] sm:$0xff]
              %195 = vst [vmem:[%s165 + $0x70] sm:$0xff] %v194
              %v196 = vld [vmem:[%s164 + $0xf0] sm:$0xff]
              %197 = vst [vmem:[%s165 + $0x78] sm:$0xff] %v196
            $region71: #{tpu_custom_call.1} parent=65 // loop_footer
              %s163 = sadd.s32 1, %s159
            $region72: #{tpu_custom_call.1} parent=65 // loop_footer_branch
              %158 = sbr.rel target = $region68
            $region73: #{tpu_custom_call.1} parent=65 // loop_exit
              _
          $region66: #{tpu_custom_call.1} parent=50 // pred_fallthru
            _
          // Predicated region
          $region74: #{tpu_custom_call.1} parent=50 // pred_check
            _
          $region75: #{tpu_custom_call.1} parent=50 // pred_check_branch
            %199 = sbr.rel target = $region77
          $region76: #{tpu_custom_call.1} parent=50 // pred_region
            _
          $region77: #{tpu_custom_call.1} parent=50 // pred_fallthru
            _
        $region51: #{tpu_custom_call.1} parent=46 // pred_fallthru
          _
        // Predicated region
        $region52: #{tpu_custom_call.1} parent=46 // pred_check
          _
        $region53: #{tpu_custom_call.1} parent=46 // pred_check_branch
          %113 = sbr.rel target = $region55
        $region54: #{tpu_custom_call.1} parent=46 // pred_region
          %s115 = ssub.s32 256, 1
          loop: start=0, step=1, limit=1
          $region56: #{tpu_custom_call.1} parent=54 // loop_pre_header
            _
          $region57: #{tpu_custom_call.1} parent=54 // loop_header
            %s117 = sphi 0, %s121
            %p118 = scmp.ge.s32.totalorder %s117, 1
            %s122 = sphi %s107, %s107
            %s123 = sphi [#allocation3], [#allocation3]
          $region58: #{tpu_custom_call.1} parent=54 // loop_header_branch
            %120 = sbr.rel (%p118) target = $region62
          $region59: #{tpu_custom_call.1} parent=54 // loop_body
            %v124 = vld [vmem:[%s122] sm:%s115]
            %125 = vst [vmem:[%s123] sm:%s115] %v124
            %v126 = vld [vmem:[%s122 + $0x10] sm:%s115]
            %127 = vst [vmem:[%s123 + $0x8] sm:%s115] %v126
            %v128 = vld [vmem:[%s122 + $0x20] sm:%s115]
            %129 = vst [vmem:[%s123 + $0x10] sm:%s115] %v128
            %v130 = vld [vmem:[%s122 + $0x30] sm:%s115]
            %131 = vst [vmem:[%s123 + $0x18] sm:%s115] %v130
            %v132 = vld [vmem:[%s122 + $0x40] sm:%s115]
            %133 = vst [vmem:[%s123 + $0x20] sm:%s115] %v132
            %v134 = vld [vmem:[%s122 + $0x50] sm:%s115]
            %135 = vst [vmem:[%s123 + $0x28] sm:%s115] %v134
            %v136 = vld [vmem:[%s122 + $0x60] sm:%s115]
            %137 = vst [vmem:[%s123 + $0x30] sm:%s115] %v136
            %v138 = vld [vmem:[%s122 + $0x70] sm:%s115]
            %139 = vst [vmem:[%s123 + $0x38] sm:%s115] %v138
            %v140 = vld [vmem:[%s122 + $0x80] sm:%s115]
            %141 = vst [vmem:[%s123 + $0x40] sm:%s115] %v140
            %v142 = vld [vmem:[%s122 + $0x90] sm:%s115]
            %143 = vst [vmem:[%s123 + $0x48] sm:%s115] %v142
            %v144 = vld [vmem:[%s122 + $0xa0] sm:%s115]
            %145 = vst [vmem:[%s123 + $0x50] sm:%s115] %v144
            %v146 = vld [vmem:[%s122 + $0xb0] sm:%s115]
            %147 = vst [vmem:[%s123 + $0x58] sm:%s115] %v146
            %v148 = vld [vmem:[%s122 + $0xc0] sm:%s115]
            %149 = vst [vmem:[%s123 + $0x60] sm:%s115] %v148
            %v150 = vld [vmem:[%s122 + $0xd0] sm:%s115]
            %151 = vst [vmem:[%s123 + $0x68] sm:%s115] %v150
            %v152 = vld [vmem:[%s122 + $0xe0] sm:%s115]
            %153 = vst [vmem:[%s123 + $0x70] sm:%s115] %v152
            %v154 = vld [vmem:[%s122 + $0xf0] sm:%s115]
            %155 = vst [vmem:[%s123 + $0x78] sm:%s115] %v154
          $region60: #{tpu_custom_call.1} parent=54 // loop_footer
            %s121 = sadd.s32 1, %s117
          $region61: #{tpu_custom_call.1} parent=54 // loop_footer_branch
            %116 = sbr.rel target = $region57
          $region62: #{tpu_custom_call.1} parent=54 // loop_exit
            _
        $region55: #{tpu_custom_call.1} parent=46 // pred_fallthru
          _
      $region47: #{tpu_custom_call.1} parent=42 // pred_fallthru
        _
      %200 = vnop
    $region43: #{tpu_custom_call.1} parent=1 // pred_fallthru
      _
    // Predicated region
    $region78: #{tpu_custom_call.1} parent=1 // pred_check
      _
    $region79: #{tpu_custom_call.1} parent=1 // pred_check_branch
      %202 = sbr.rel (0) target = $region81
    $region80: #{tpu_custom_call.1} parent=1 // pred_region
      _
    $region81: #{tpu_custom_call.1} parent=1 // pred_fallthru
      _
    // Predicated region
    $region82: #{tpu_custom_call.1} parent=1 // pred_check
      _
    $region83: #{tpu_custom_call.1} parent=1 // pred_check_branch
      %204 = sbr.rel (0) target = $region85
    $region84: #{tpu_custom_call.1} parent=1 // pred_region
      _
    $region85: #{tpu_custom_call.1} parent=1 // pred_fallthru
      _
    // Predicated region
    $region86: #{tpu_custom_call.1} parent=1 // pred_check
      _
    $region87: #{tpu_custom_call.1} parent=1 // pred_check_branch
      %206 = sbr.rel (0) target = $region89
    $region88: #{tpu_custom_call.1} parent=1 // pred_region
      _
    $region89: #{tpu_custom_call.1} parent=1 // pred_fallthru
      _
    // Predicated region
    $region90: #{tpu_custom_call.1} parent=1 // pred_check
      _
    $region91: #{tpu_custom_call.1} parent=1 // pred_check_branch
      %208 = sbr.rel (0) target = $region93
    $region92: #{tpu_custom_call.1} parent=1 // pred_region
      _
    $region93: #{tpu_custom_call.1} parent=1 // pred_fallthru
      _
    // Predicated region
    $region94: #{tpu_custom_call.1} parent=1 // pred_check
      _
    $region95: #{tpu_custom_call.1} parent=1 // pred_check_branch
      %210 = sbr.rel (0) target = $region97
    $region96: #{tpu_custom_call.1} parent=1 // pred_region
      _
    $region97: #{tpu_custom_call.1} parent=1 // pred_fallthru
      _
    %v211 = vld [vmem:[#allocation2] sm:$0xff]
    %v212 = vld [vmem:[#allocation2 + $0x8] sm:$0xff]
    %v213 = vld [vmem:[#allocation2 + $0x10] sm:$0xff]
    %v214 = vld [vmem:[#allocation2 + $0x18] sm:$0xff]
    %v215 = vld [vmem:[#allocation2 + $0x20] sm:$0xff]
    %v216 = vld [vmem:[#allocation2 + $0x28] sm:$0xff]
    %v217 = vld [vmem:[#allocation2 + $0x30] sm:$0xff]
    %v218 = vld [vmem:[#allocation2 + $0x38] sm:$0xff]
    %v219 = vld [vmem:[#allocation2 + $0x40] sm:$0xff]
    %v220 = vld [vmem:[#allocation2 + $0x48] sm:$0xff]
    %v221 = vld [vmem:[#allocation2 + $0x50] sm:$0xff]
    %v222 = vld [vmem:[#allocation2 + $0x58] sm:$0xff]
    %v223 = vld [vmem:[#allocation2 + $0x60] sm:$0xff]
    %v224 = vld [vmem:[#allocation2 + $0x68] sm:$0xff]
    %v225 = vld [vmem:[#allocation2 + $0x70] sm:$0xff]
    %v226 = vld [vmem:[#allocation2 + $0x78] sm:$0xff]
    %v227 = vld [vmem:[#allocation3] sm:$0xff]
    %v228 = vld [vmem:[#allocation3 + $0x8] sm:$0xff]
    %v229 = vld [vmem:[#allocation3 + $0x10] sm:$0xff]
    %v230 = vld [vmem:[#allocation3 + $0x18] sm:$0xff]
    %v231 = vld [vmem:[#allocation3 + $0x20] sm:$0xff]
    %v232 = vld [vmem:[#allocation3 + $0x28] sm:$0xff]
    %v233 = vld [vmem:[#allocation3 + $0x30] sm:$0xff]
    %v234 = vld [vmem:[#allocation3 + $0x38] sm:$0xff]
    %v235 = vld [vmem:[#allocation3 + $0x40] sm:$0xff]
    %v236 = vld [vmem:[#allocation3 + $0x48] sm:$0xff]
    %v237 = vld [vmem:[#allocation3 + $0x50] sm:$0xff]
    %v238 = vld [vmem:[#allocation3 + $0x58] sm:$0xff]
    %v239 = vld [vmem:[#allocation3 + $0x60] sm:$0xff]
    %v240 = vld [vmem:[#allocation3 + $0x68] sm:$0xff]
    %v241 = vld [vmem:[#allocation3 + $0x70] sm:$0xff]
    %v242 = vld [vmem:[#allocation3 + $0x78] sm:$0xff]
    %vm243 = vcmask 64512
    %v244 = vsel %vm243, %v211, 0.0
    %245 = vadd.xlane.f32.xlu0 %v244
    %v246 = vpop.xlane.xlu0 %245
    %v247 = vsel %vm243, %v212, 0.0
    %248 = vadd.xlane.f32.xlu0 %v247
    %v249 = vpop.xlane.xlu0 %248
    %v250 = vsel %vm243, %v213, 0.0
    %251 = vadd.xlane.f32.xlu0 %v250
    %v252 = vpop.xlane.xlu0 %251
    %v253 = vsel %vm243, %v214, 0.0
    %254 = vadd.xlane.f32.xlu0 %v253
    %v255 = vpop.xlane.xlu0 %254
    %v256 = vsel %vm243, %v215, 0.0
    %257 = vadd.xlane.f32.xlu0 %v256
    %v258 = vpop.xlane.xlu0 %257
    %v259 = vsel %vm243, %v216, 0.0
    %260 = vadd.xlane.f32.xlu0 %v259
    %v261 = vpop.xlane.xlu0 %260
    %v262 = vsel %vm243, %v217, 0.0
    %263 = vadd.xlane.f32.xlu0 %v262
    %v264 = vpop.xlane.xlu0 %263
    %v265 = vsel %vm243, %v218, 0.0
    %266 = vadd.xlane.f32.xlu0 %v265
    %v267 = vpop.xlane.xlu0 %266
    %v268 = vsel %vm243, %v219, 0.0
    %269 = vadd.xlane.f32.xlu0 %v268
    %v270 = vpop.xlane.xlu0 %269
    %v271 = vsel %vm243, %v220, 0.0
    %272 = vadd.xlane.f32.xlu0 %v271
    %v273 = vpop.xlane.xlu0 %272
    %v274 = vsel %vm243, %v221, 0.0
    %275 = vadd.xlane.f32.xlu0 %v274
    %v276 = vpop.xlane.xlu0 %275
    %v277 = vsel %vm243, %v222, 0.0
    %278 = vadd.xlane.f32.xlu0 %v277
    %v279 = vpop.xlane.xlu0 %278
    %v280 = vsel %vm243, %v223, 0.0
    %281 = vadd.xlane.f32.xlu0 %v280
    %v282 = vpop.xlane.xlu0 %281
    %v283 = vsel %vm243, %v224, 0.0
    %284 = vadd.xlane.f32.xlu0 %v283
    %v285 = vpop.xlane.xlu0 %284
    %v286 = vsel %vm243, %v225, 0.0
    %287 = vadd.xlane.f32.xlu0 %v286
    %v288 = vpop.xlane.xlu0 %287
    %v289 = vsel %vm243, %v226, 0.0
    %290 = vadd.xlane.f32.xlu0 %v289
    %v291 = vpop.xlane.xlu0 %290
    %v292 = vsel %vm243, %v227, 0.0
    %293 = vadd.xlane.f32.xlu0 %v292
    %v294 = vpop.xlane.xlu0 %293
    %v295 = vsel %vm243, %v228, 0.0
    %296 = vadd.xlane.f32.xlu0 %v295
    %v297 = vpop.xlane.xlu0 %296
    %v298 = vsel %vm243, %v229, 0.0
    %299 = vadd.xlane.f32.xlu0 %v298
    %v300 = vpop.xlane.xlu0 %299
    %v301 = vsel %vm243, %v230, 0.0
    %302 = vadd.xlane.f32.xlu0 %v301
    %v303 = vpop.xlane.xlu0 %302
    %v304 = vsel %vm243, %v231, 0.0
    %305 = vadd.xlane.f32.xlu0 %v304
    %v306 = vpop.xlane.xlu0 %305
    %v307 = vsel %vm243, %v232, 0.0
    %308 = vadd.xlane.f32.xlu0 %v307
    %v309 = vpop.xlane.xlu0 %308
    %v310 = vsel %vm243, %v233, 0.0
    %311 = vadd.xlane.f32.xlu0 %v310
    %v312 = vpop.xlane.xlu0 %311
    %v313 = vsel %vm243, %v234, 0.0
    %314 = vadd.xlane.f32.xlu0 %v313
    %v315 = vpop.xlane.xlu0 %314
    %v316 = vsel %vm243, %v235, 0.0
    %317 = vadd.xlane.f32.xlu0 %v316
    %v318 = vpop.xlane.xlu0 %317
    %v319 = vsel %vm243, %v236, 0.0
    %320 = vadd.xlane.f32.xlu0 %v319
    %v321 = vpop.xlane.xlu0 %320
    %v322 = vsel %vm243, %v237, 0.0
    %323 = vadd.xlane.f32.xlu0 %v322
    %v324 = vpop.xlane.xlu0 %323
    %v325 = vsel %vm243, %v238, 0.0
    %326 = vadd.xlane.f32.xlu0 %v325
    %v327 = vpop.xlane.xlu0 %326
    %v328 = vsel %vm243, %v239, 0.0
    %329 = vadd.xlane.f32.xlu0 %v328
    %v330 = vpop.xlane.xlu0 %329
    %v331 = vsel %vm243, %v240, 0.0
    %332 = vadd.xlane.f32.xlu0 %v331
    %v333 = vpop.xlane.xlu0 %332
    %v334 = vsel %vm243, %v241, 0.0
    %335 = vadd.xlane.f32.xlu0 %v334
    %v336 = vpop.xlane.xlu0 %335
    %v337 = vsel %vm243, %v242, 0.0
    %338 = vadd.xlane.f32.xlu0 %v337
    %v339 = vpop.xlane.xlu0 %338
    %v340 = vadd.f32 %v246, %v294
    %v341 = vadd.f32 %v249, %v297
    %v342 = vadd.f32 %v252, %v300
    %v343 = vadd.f32 %v255, %v303
    %v344 = vadd.f32 %v258, %v306
    %v345 = vadd.f32 %v261, %v309
    %v346 = vadd.f32 %v264, %v312
    %v347 = vadd.f32 %v267, %v315
    %v348 = vadd.f32 %v270, %v318
    %v349 = vadd.f32 %v273, %v321
    %v350 = vadd.f32 %v276, %v324
    %v351 = vadd.f32 %v279, %v327
    %v352 = vadd.f32 %v282, %v330
    %v353 = vadd.f32 %v285, %v333
    %v354 = vadd.f32 %v288, %v336
    %v355 = vadd.f32 %v291, %v339
    %v356 = vmul.f32 %v340, 0.0625
    %v357 = vmul.f32 %v341, 0.0625
    %v358 = vmul.f32 %v342, 0.0625
    %v359 = vmul.f32 %v343, 0.0625
    %v360 = vmul.f32 %v344, 0.0625
    %v361 = vmul.f32 %v345, 0.0625
    %v362 = vmul.f32 %v346, 0.0625
    %v363 = vmul.f32 %v347, 0.0625
    %v364 = vmul.f32 %v348, 0.0625
    %v365 = vmul.f32 %v349, 0.0625
    %v366 = vmul.f32 %v350, 0.0625
    %v367 = vmul.f32 %v351, 0.0625
    %v368 = vmul.f32 %v352, 0.0625
    %v369 = vmul.f32 %v353, 0.0625
    %v370 = vmul.f32 %v354, 0.0625
    %v371 = vmul.f32 %v355, 0.0625
    %v372 = vsub.f32 %v211, %v356
    %v373 = vsub.f32 %v212, %v357
    %v374 = vsub.f32 %v213, %v358
    %v375 = vsub.f32 %v214, %v359
    %v376 = vsub.f32 %v215, %v360
    %v377 = vsub.f32 %v216, %v361
    %v378 = vsub.f32 %v217, %v362
    %v379 = vsub.f32 %v218, %v363
    %v380 = vsub.f32 %v219, %v364
    %v381 = vsub.f32 %v220, %v365
    %v382 = vsub.f32 %v221, %v366
    %v383 = vsub.f32 %v222, %v367
    %v384 = vsub.f32 %v223, %v368
    %v385 = vsub.f32 %v224, %v369
    %v386 = vsub.f32 %v225, %v370
    %v387 = vsub.f32 %v226, %v371
    %v388 = vsub.f32 %v227, %v356
    %v389 = vsub.f32 %v228, %v357
    %v390 = vsub.f32 %v229, %v358
    %v391 = vsub.f32 %v230, %v359
    %v392 = vsub.f32 %v231, %v360
    %v393 = vsub.f32 %v232, %v361
    %v394 = vsub.f32 %v233, %v362
    %v395 = vsub.f32 %v234, %v363
    %v396 = vsub.f32 %v235, %v364
    %v397 = vsub.f32 %v236, %v365
    %v398 = vsub.f32 %v237, %v366
    %v399 = vsub.f32 %v238, %v367
    %v400 = vsub.f32 %v239, %v368
    %v401 = vsub.f32 %v240, %v369
    %v402 = vsub.f32 %v241, %v370
    %v403 = vsub.f32 %v242, %v371
    %v404 = vmul.f32 %v372, %v372
    %v405 = vmul.f32 %v373, %v373
    %v406 = vmul.f32 %v374, %v374
    %v407 = vmul.f32 %v375, %v375
    %v408 = vmul.f32 %v376, %v376
    %v409 = vmul.f32 %v377, %v377
    %v410 = vmul.f32 %v378, %v378
    %v411 = vmul.f32 %v379, %v379
    %v412 = vmul.f32 %v380, %v380
    %v413 = vmul.f32 %v381, %v381
    %v414 = vmul.f32 %v382, %v382
    %v415 = vmul.f32 %v383, %v383
    %v416 = vmul.f32 %v384, %v384
    %v417 = vmul.f32 %v385, %v385
    %v418 = vmul.f32 %v386, %v386
    %v419 = vmul.f32 %v387, %v387
    %v420 = vsel %vm243, %v404, 0.0
    %421 = vadd.xlane.f32.xlu0 %v420
    %v422 = vpop.xlane.xlu0 %421
    %v423 = vsel %vm243, %v405, 0.0
    %424 = vadd.xlane.f32.xlu0 %v423
    %v425 = vpop.xlane.xlu0 %424
    %v426 = vsel %vm243, %v406, 0.0
    %427 = vadd.xlane.f32.xlu0 %v426
    %v428 = vpop.xlane.xlu0 %427
    %v429 = vsel %vm243, %v407, 0.0
    %430 = vadd.xlane.f32.xlu0 %v429
    %v431 = vpop.xlane.xlu0 %430
    %v432 = vsel %vm243, %v408, 0.0
    %433 = vadd.xlane.f32.xlu0 %v432
    %v434 = vpop.xlane.xlu0 %433
    %v435 = vsel %vm243, %v409, 0.0
    %436 = vadd.xlane.f32.xlu0 %v435
    %v437 = vpop.xlane.xlu0 %436
    %v438 = vsel %vm243, %v410, 0.0
    %439 = vadd.xlane.f32.xlu0 %v438
    %v440 = vpop.xlane.xlu0 %439
    %v441 = vsel %vm243, %v411, 0.0
    %442 = vadd.xlane.f32.xlu0 %v441
    %v443 = vpop.xlane.xlu0 %442
    %v444 = vsel %vm243, %v412, 0.0
    %445 = vadd.xlane.f32.xlu0 %v444
    %v446 = vpop.xlane.xlu0 %445
    %v447 = vsel %vm243, %v413, 0.0
    %448 = vadd.xlane.f32.xlu0 %v447
    %v449 = vpop.xlane.xlu0 %448
    %v450 = vsel %vm243, %v414, 0.0
    %451 = vadd.xlane.f32.xlu0 %v450
    %v452 = vpop.xlane.xlu0 %451
    %v453 = vsel %vm243, %v415, 0.0
    %454 = vadd.xlane.f32.xlu0 %v453
    %v455 = vpop.xlane.xlu0 %454
    %v456 = vsel %vm243, %v416, 0.0
    %457 = vadd.xlane.f32.xlu0 %v456
    %v458 = vpop.xlane.xlu0 %457
    %v459 = vsel %vm243, %v417, 0.0
    %460 = vadd.xlane.f32.xlu0 %v459
    %v461 = vpop.xlane.xlu0 %460
    %v462 = vsel %vm243, %v418, 0.0
    %463 = vadd.xlane.f32.xlu0 %v462
    %v464 = vpop.xlane.xlu0 %463
    %v465 = vsel %vm243, %v419, 0.0
    %466 = vadd.xlane.f32.xlu0 %v465
    %v467 = vpop.xlane.xlu0 %466
    %v468 = vmul.f32 %v388, %v388
    %v469 = vmul.f32 %v389, %v389
    %v470 = vmul.f32 %v390, %v390
    %v471 = vmul.f32 %v391, %v391
    %v472 = vmul.f32 %v392, %v392
    %v473 = vmul.f32 %v393, %v393
    %v474 = vmul.f32 %v394, %v394
    %v475 = vmul.f32 %v395, %v395
    %v476 = vmul.f32 %v396, %v396
    %v477 = vmul.f32 %v397, %v397
    %v478 = vmul.f32 %v398, %v398
    %v479 = vmul.f32 %v399, %v399
    %v480 = vmul.f32 %v400, %v400
    %v481 = vmul.f32 %v401, %v401
    %v482 = vmul.f32 %v402, %v402
    %v483 = vmul.f32 %v403, %v403
    %v484 = vsel %vm243, %v468, 0.0
    %485 = vadd.xlane.f32.xlu0 %v484
    %v486 = vpop.xlane.xlu0 %485
    %v487 = vsel %vm243, %v469, 0.0
    %488 = vadd.xlane.f32.xlu0 %v487
    %v489 = vpop.xlane.xlu0 %488
    %v490 = vsel %vm243, %v470, 0.0
    %491 = vadd.xlane.f32.xlu0 %v490
    %v492 = vpop.xlane.xlu0 %491
    %v493 = vsel %vm243, %v471, 0.0
    %494 = vadd.xlane.f32.xlu0 %v493
    %v495 = vpop.xlane.xlu0 %494
    %v496 = vsel %vm243, %v472, 0.0
    %497 = vadd.xlane.f32.xlu0 %v496
    %v498 = vpop.xlane.xlu0 %497
    %v499 = vsel %vm243, %v473, 0.0
    %500 = vadd.xlane.f32.xlu0 %v499
    %v501 = vpop.xlane.xlu0 %500
    %v502 = vsel %vm243, %v474, 0.0
    %503 = vadd.xlane.f32.xlu0 %v502
    %v504 = vpop.xlane.xlu0 %503
    %v505 = vsel %vm243, %v475, 0.0
    %506 = vadd.xlane.f32.xlu0 %v505
    %v507 = vpop.xlane.xlu0 %506
    %v508 = vsel %vm243, %v476, 0.0
    %509 = vadd.xlane.f32.xlu0 %v508
    %v510 = vpop.xlane.xlu0 %509
    %v511 = vsel %vm243, %v477, 0.0
    %512 = vadd.xlane.f32.xlu0 %v511
    %v513 = vpop.xlane.xlu0 %512
    %v514 = vsel %vm243, %v478, 0.0
    %515 = vadd.xlane.f32.xlu0 %v514
    %v516 = vpop.xlane.xlu0 %515
    %v517 = vsel %vm243, %v479, 0.0
    %518 = vadd.xlane.f32.xlu0 %v517
    %v519 = vpop.xlane.xlu0 %518
    %v520 = vsel %vm243, %v480, 0.0
    %521 = vadd.xlane.f32.xlu0 %v520
    %v522 = vpop.xlane.xlu0 %521
    %v523 = vsel %vm243, %v481, 0.0
    %524 = vadd.xlane.f32.xlu0 %v523
    %v525 = vpop.xlane.xlu0 %524
    %v526 = vsel %vm243, %v482, 0.0
    %527 = vadd.xlane.f32.xlu0 %v526
    %v528 = vpop.xlane.xlu0 %527
    %v529 = vsel %vm243, %v483, 0.0
    %530 = vadd.xlane.f32.xlu0 %v529
    %v531 = vpop.xlane.xlu0 %530
    %v532 = vadd.f32 %v422, %v486
    %v533 = vadd.f32 %v425, %v489
    %v534 = vadd.f32 %v428, %v492
    %v535 = vadd.f32 %v431, %v495
    %v536 = vadd.f32 %v434, %v498
    %v537 = vadd.f32 %v437, %v501
    %v538 = vadd.f32 %v440, %v504
    %v539 = vadd.f32 %v443, %v507
    %v540 = vadd.f32 %v446, %v510
    %v541 = vadd.f32 %v449, %v513
    %v542 = vadd.f32 %v452, %v516
    %v543 = vadd.f32 %v455, %v519
    %v544 = vadd.f32 %v458, %v522
    %v545 = vadd.f32 %v461, %v525
    %v546 = vadd.f32 %v464, %v528
    %v547 = vadd.f32 %v467, %v531
    %v548 = vmul.f32 %v532, 0.0625
    %v549 = vmul.f32 %v533, 0.0625
    %v550 = vmul.f32 %v534, 0.0625
    %v551 = vmul.f32 %v535, 0.0625
    %v552 = vmul.f32 %v536, 0.0625
    %v553 = vmul.f32 %v537, 0.0625
    %v554 = vmul.f32 %v538, 0.0625
    %v555 = vmul.f32 %v539, 0.0625
    %v556 = vmul.f32 %v540, 0.0625
    %v557 = vmul.f32 %v541, 0.0625
    %v558 = vmul.f32 %v542, 0.0625
    %v559 = vmul.f32 %v543, 0.0625
    %v560 = vmul.f32 %v544, 0.0625
    %v561 = vmul.f32 %v545, 0.0625
    %v562 = vmul.f32 %v546, 0.0625
    %v563 = vmul.f32 %v547, 0.0625
    %v564 = vadd.f32 %v548, 1e-05
    %v565 = vadd.f32 %v549, 1e-05
    %v566 = vadd.f32 %v550, 1e-05
    %v567 = vadd.f32 %v551, 1e-05
    %v568 = vadd.f32 %v552, 1e-05
    %v569 = vadd.f32 %v553, 1e-05
    %v570 = vadd.f32 %v554, 1e-05
    %v571 = vadd.f32 %v555, 1e-05
    %v572 = vadd.f32 %v556, 1e-05
    %v573 = vadd.f32 %v557, 1e-05
    %v574 = vadd.f32 %v558, 1e-05
    %v575 = vadd.f32 %v559, 1e-05
    %v576 = vadd.f32 %v560, 1e-05
    %v577 = vadd.f32 %v561, 1e-05
    %v578 = vadd.f32 %v562, 1e-05
    %v579 = vadd.f32 %v563, 1e-05
    %v580 = vrsqrt.pop %v564
    %v581 = vmul.f32 %v580, %v564
    %v582 = vmul.f32 %v581, %v580
    %v583 = vmul.f32 0.5, %v582
    %v584 = vsub.f32 1.5, %v583
    %v585 = vmul.f32 %v580, %v584
    %vm586 = vweird.f32 %v564
    %vm587 = vweird.f32 %v580
    %vm588 = vmor %vm586, %vm587
    %v589 = vsel %vm588, %v580, %v585
    %v590 = vrsqrt.pop %v565
    %v591 = vmul.f32 %v590, %v565
    %v592 = vmul.f32 %v591, %v590
    %v593 = vmul.f32 0.5, %v592
    %v594 = vsub.f32 1.5, %v593
    %v595 = vmul.f32 %v590, %v594
    %vm596 = vweird.f32 %v565
    %vm597 = vweird.f32 %v590
    %vm598 = vmor %vm596, %vm597
    %v599 = vsel %vm598, %v590, %v595
    %v600 = vrsqrt.pop %v566
    %v601 = vmul.f32 %v600, %v566
    %v602 = vmul.f32 %v601, %v600
    %v603 = vmul.f32 0.5, %v602
    %v604 = vsub.f32 1.5, %v603
    %v605 = vmul.f32 %v600, %v604
    %vm606 = vweird.f32 %v566
    %vm607 = vweird.f32 %v600
    %vm608 = vmor %vm606, %vm607
    %v609 = vsel %vm608, %v600, %v605
    %v610 = vrsqrt.pop %v567
    %v611 = vmul.f32 %v610, %v567
    %v612 = vmul.f32 %v611, %v610
    %v613 = vmul.f32 0.5, %v612
    %v614 = vsub.f32 1.5, %v613
    %v615 = vmul.f32 %v610, %v614
    %vm616 = vweird.f32 %v567
    %vm617 = vweird.f32 %v610
    %vm618 = vmor %vm616, %vm617
    %v619 = vsel %vm618, %v610, %v615
    %v620 = vrsqrt.pop %v568
    %v621 = vmul.f32 %v620, %v568
    %v622 = vmul.f32 %v621, %v620
    %v623 = vmul.f32 0.5, %v622
    %v624 = vsub.f32 1.5, %v623
    %v625 = vmul.f32 %v620, %v624
    %vm626 = vweird.f32 %v568
    %vm627 = vweird.f32 %v620
    %vm628 = vmor %vm626, %vm627
    %v629 = vsel %vm628, %v620, %v625
    %v630 = vrsqrt.pop %v569
    %v631 = vmul.f32 %v630, %v569
    %v632 = vmul.f32 %v631, %v630
    %v633 = vmul.f32 0.5, %v632
    %v634 = vsub.f32 1.5, %v633
    %v635 = vmul.f32 %v630, %v634
    %vm636 = vweird.f32 %v569
    %vm637 = vweird.f32 %v630
    %vm638 = vmor %vm636, %vm637
    %v639 = vsel %vm638, %v630, %v635
    %v640 = vrsqrt.pop %v570
    %v641 = vmul.f32 %v640, %v570
    %v642 = vmul.f32 %v641, %v640
    %v643 = vmul.f32 0.5, %v642
    %v644 = vsub.f32 1.5, %v643
    %v645 = vmul.f32 %v640, %v644
    %vm646 = vweird.f32 %v570
    %vm647 = vweird.f32 %v640
    %vm648 = vmor %vm646, %vm647
    %v649 = vsel %vm648, %v640, %v645
    %v650 = vrsqrt.pop %v571
    %v651 = vmul.f32 %v650, %v571
    %v652 = vmul.f32 %v651, %v650
    %v653 = vmul.f32 0.5, %v652
    %v654 = vsub.f32 1.5, %v653
    %v655 = vmul.f32 %v650, %v654
    %vm656 = vweird.f32 %v571
    %vm657 = vweird.f32 %v650
    %vm658 = vmor %vm656, %vm657
    %v659 = vsel %vm658, %v650, %v655
    %v660 = vrsqrt.pop %v572
    %v661 = vmul.f32 %v660, %v572
    %v662 = vmul.f32 %v661, %v660
    %v663 = vmul.f32 0.5, %v662
    %v664 = vsub.f32 1.5, %v663
    %v665 = vmul.f32 %v660, %v664
    %vm666 = vweird.f32 %v572
    %vm667 = vweird.f32 %v660
    %vm668 = vmor %vm666, %vm667
    %v669 = vsel %vm668, %v660, %v665
    %v670 = vrsqrt.pop %v573
    %v671 = vmul.f32 %v670, %v573
    %v672 = vmul.f32 %v671, %v670
    %v673 = vmul.f32 0.5, %v672
    %v674 = vsub.f32 1.5, %v673
    %v675 = vmul.f32 %v670, %v674
    %vm676 = vweird.f32 %v573
    %vm677 = vweird.f32 %v670
    %vm678 = vmor %vm676, %vm677
    %v679 = vsel %vm678, %v670, %v675
    %v680 = vrsqrt.pop %v574
    %v681 = vmul.f32 %v680, %v574
    %v682 = vmul.f32 %v681, %v680
    %v683 = vmul.f32 0.5, %v682
    %v684 = vsub.f32 1.5, %v683
    %v685 = vmul.f32 %v680, %v684
    %vm686 = vweird.f32 %v574
    %vm687 = vweird.f32 %v680
    %vm688 = vmor %vm686, %vm687
    %v689 = vsel %vm688, %v680, %v685
    %v690 = vrsqrt.pop %v575
    %v691 = vmul.f32 %v690, %v575
    %v692 = vmul.f32 %v691, %v690
    %v693 = vmul.f32 0.5, %v692
    %v694 = vsub.f32 1.5, %v693
    %v695 = vmul.f32 %v690, %v694
    %vm696 = vweird.f32 %v575
    %vm697 = vweird.f32 %v690
    %vm698 = vmor %vm696, %vm697
    %v699 = vsel %vm698, %v690, %v695
    %v700 = vrsqrt.pop %v576
    %v701 = vmul.f32 %v700, %v576
    %v702 = vmul.f32 %v701, %v700
    %v703 = vmul.f32 0.5, %v702
    %v704 = vsub.f32 1.5, %v703
    %v705 = vmul.f32 %v700, %v704
    %vm706 = vweird.f32 %v576
    %vm707 = vweird.f32 %v700
    %vm708 = vmor %vm706, %vm707
    %v709 = vsel %vm708, %v700, %v705
    %v710 = vrsqrt.pop %v577
    %v711 = vmul.f32 %v710, %v577
    %v712 = vmul.f32 %v711, %v710
    %v713 = vmul.f32 0.5, %v712
    %v714 = vsub.f32 1.5, %v713
    %v715 = vmul.f32 %v710, %v714
    %vm716 = vweird.f32 %v577
    %vm717 = vweird.f32 %v710
    %vm718 = vmor %vm716, %vm717
    %v719 = vsel %vm718, %v710, %v715
    %v720 = vrsqrt.pop %v578
    %v721 = vmul.f32 %v720, %v578
    %v722 = vmul.f32 %v721, %v720
    %v723 = vmul.f32 0.5, %v722
    %v724 = vsub.f32 1.5, %v723
    %v725 = vmul.f32 %v720, %v724
    %vm726 = vweird.f32 %v578
    %vm727 = vweird.f32 %v720
    %vm728 = vmor %vm726, %vm727
    %v729 = vsel %vm728, %v720, %v725
    %v730 = vrsqrt.pop %v579
    %v731 = vmul.f32 %v730, %v579
    %v732 = vmul.f32 %v731, %v730
    %v733 = vmul.f32 0.5, %v732
    %v734 = vsub.f32 1.5, %v733
    %v735 = vmul.f32 %v730, %v734
    %vm736 = vweird.f32 %v579
    %vm737 = vweird.f32 %v730
    %vm738 = vmor %vm736, %vm737
    %v739 = vsel %vm738, %v730, %v735
    %v740 = vmul.f32 %v372, %v589
    %v741 = vmul.f32 %v373, %v599
    %v742 = vmul.f32 %v374, %v609
    %v743 = vmul.f32 %v375, %v619
    %v744 = vmul.f32 %v376, %v629
    %v745 = vmul.f32 %v377, %v639
    %v746 = vmul.f32 %v378, %v649
    %v747 = vmul.f32 %v379, %v659
    %v748 = vmul.f32 %v380, %v669
    %v749 = vmul.f32 %v381, %v679
    %v750 = vmul.f32 %v382, %v689
    %v751 = vmul.f32 %v383, %v699
    %v752 = vmul.f32 %v384, %v709
    %v753 = vmul.f32 %v385, %v719
    %v754 = vmul.f32 %v386, %v729
    %v755 = vmul.f32 %v387, %v739
    %v756 = vmul.f32 %v388, %v589
    %v757 = vmul.f32 %v389, %v599
    %v758 = vmul.f32 %v390, %v609
    %v759 = vmul.f32 %v391, %v619
    %v760 = vmul.f32 %v392, %v629
    %v761 = vmul.f32 %v393, %v639
    %v762 = vmul.f32 %v394, %v649
    %v763 = vmul.f32 %v395, %v659
    %v764 = vmul.f32 %v396, %v669
    %v765 = vmul.f32 %v397, %v679
    %v766 = vmul.f32 %v398, %v689
    %v767 = vmul.f32 %v399, %v699
    %v768 = vmul.f32 %v400, %v709
    %v769 = vmul.f32 %v401, %v719
    %v770 = vmul.f32 %v402, %v729
    %v771 = vmul.f32 %v403, %v739
    %v772 = vld [vmem:[%s2] sm:$0xff]
    %v773 = vld [vmem:[%s3] sm:$0xff]
    %v775 = vsel %vm243, %v756, 0
    %v778 = vsel %vm243, %v757, 0
    %v781 = vsel %vm243, %v758, 0
    %v784 = vsel %vm243, %v759, 0
    %v787 = vsel %vm243, %v760, 0
    %v790 = vsel %vm243, %v761, 0
    %v793 = vsel %vm243, %v762, 0
    %v796 = vsel %vm243, %v763, 0
    %v799 = vsel %vm243, %v764, 0
    %v802 = vsel %vm243, %v765, 0
    %v805 = vsel %vm243, %v766, 0
    %v808 = vsel %vm243, %v767, 0
    %v811 = vsel %vm243, %v768, 0
    %v814 = vsel %vm243, %v769, 0
    %v817 = vsel %vm243, %v770, 0
    %v820 = vsel %vm243, %v771, 0
    %822 = vmatpush.msra.mxu0 0.0
    %823 = vmatpush.msra.mxu0 0.0
    %824 = vmatpush.msra.mxu0 0.0
    %825 = vmatpush.msra.mxu0 0.0
    %826 = vmatpush.msra.mxu0 0.0
    %827 = vmatpush.msra.mxu0 0.0
    %828 = vmatpush.msra.mxu0 0.0
    %829 = vmatpush.msra.mxu0 0.0
    %830 = vmatpush.msra.mxu0 0.0
    %831 = vmatpush.msra.mxu0 0.0
    %832 = vmatpush.msra.mxu0 0.0
    %833 = vmatpush.msra.mxu0 0.0
    %834 = vmatpush.msra.mxu0 0.0
    %835 = vmatpush.msra.mxu0 0.0
    %836 = vmatpush.msra.mxu0 0.0
    %837 = vmatpush.msra.mxu0 %v773
    %838 = vmatmul.f32.gmra.mxu0 %v775
    %v839 = vpop.f32.mrf.mxu0
    %v840 = vadd.f32 0.0, %v839
    %841 = vmatmul.f32.gmra.mxu0 %v778
    %v842 = vpop.f32.mrf.mxu0
    %v843 = vadd.f32 0.0, %v842
    %844 = vmatmul.f32.gmra.mxu0 %v781
    %v845 = vpop.f32.mrf.mxu0
    %v846 = vadd.f32 0.0, %v845
    %847 = vmatmul.f32.gmra.mxu0 %v784
    %v848 = vpop.f32.mrf.mxu0
    %v849 = vadd.f32 0.0, %v848
    %850 = vmatmul.f32.gmra.mxu0 %v787
    %v851 = vpop.f32.mrf.mxu0
    %v852 = vadd.f32 0.0, %v851
    %853 = vmatmul.f32.gmra.mxu0 %v790
    %v854 = vpop.f32.mrf.mxu0
    %v855 = vadd.f32 0.0, %v854
    %856 = vmatmul.f32.gmra.mxu0 %v793
    %v857 = vpop.f32.mrf.mxu0
    %v858 = vadd.f32 0.0, %v857
    %859 = vmatmul.f32.gmra.mxu0 %v796
    %v860 = vpop.f32.mrf.mxu0
    %v861 = vadd.f32 0.0, %v860
    %862 = vmatmul.f32.gmra.mxu0 %v799
    %v863 = vpop.f32.mrf.mxu0
    %v864 = vadd.f32 0.0, %v863
    %865 = vmatmul.f32.gmra.mxu0 %v802
    %v866 = vpop.f32.mrf.mxu0
    %v867 = vadd.f32 0.0, %v866
    %868 = vmatmul.f32.gmra.mxu0 %v805
    %v869 = vpop.f32.mrf.mxu0
    %v870 = vadd.f32 0.0, %v869
    %871 = vmatmul.f32.gmra.mxu0 %v808
    %v872 = vpop.f32.mrf.mxu0
    %v873 = vadd.f32 0.0, %v872
    %874 = vmatmul.f32.gmra.mxu0 %v811
    %v875 = vpop.f32.mrf.mxu0
    %v876 = vadd.f32 0.0, %v875
    %877 = vmatmul.f32.gmra.mxu0 %v814
    %v878 = vpop.f32.mrf.mxu0
    %v879 = vadd.f32 0.0, %v878
    %880 = vmatmul.f32.gmra.mxu0 %v817
    %v881 = vpop.f32.mrf.mxu0
    %v882 = vadd.f32 0.0, %v881
    %883 = vmatmul.f32.gmra.mxu0 %v820
    %v884 = vpop.f32.mrf.mxu0
    %v885 = vadd.f32 0.0, %v884
    %886 = vdwg.mxu0
    %v888 = vsel %vm243, %v740, 0
    %v891 = vsel %vm243, %v741, 0
    %v894 = vsel %vm243, %v742, 0
    %v897 = vsel %vm243, %v743, 0
    %v900 = vsel %vm243, %v744, 0
    %v903 = vsel %vm243, %v745, 0
    %v906 = vsel %vm243, %v746, 0
    %v909 = vsel %vm243, %v747, 0
    %v912 = vsel %vm243, %v748, 0
    %v915 = vsel %vm243, %v749, 0
    %v918 = vsel %vm243, %v750, 0
    %v921 = vsel %vm243, %v751, 0
    %v924 = vsel %vm243, %v752, 0
    %v927 = vsel %vm243, %v753, 0
    %v930 = vsel %vm243, %v754, 0
    %v933 = vsel %vm243, %v755, 0
    %935 = vmatpush.msra.mxu0 0.0
    %936 = vmatpush.msra.mxu0 0.0
    %937 = vmatpush.msra.mxu0 0.0
    %938 = vmatpush.msra.mxu0 0.0
    %939 = vmatpush.msra.mxu0 0.0
    %940 = vmatpush.msra.mxu0 0.0
    %941 = vmatpush.msra.mxu0 0.0
    %942 = vmatpush.msra.mxu0 0.0
    %943 = vmatpush.msra.mxu0 0.0
    %944 = vmatpush.msra.mxu0 0.0
    %945 = vmatpush.msra.mxu0 0.0
    %946 = vmatpush.msra.mxu0 0.0
    %947 = vmatpush.msra.mxu0 0.0
    %948 = vmatpush.msra.mxu0 0.0
    %949 = vmatpush.msra.mxu0 0.0
    %950 = vmatpush.msra.mxu0 %v772
    %951 = vmatmul.f32.gmra.mxu0 %v888
    %v952 = vpop.f32.mrf.mxu0
    %v953 = vadd.f32 %v840, %v952
    %954 = vmatmul.f32.gmra.mxu0 %v891
    %v955 = vpop.f32.mrf.mxu0
    %v956 = vadd.f32 %v843, %v955
    %957 = vmatmul.f32.gmra.mxu0 %v894
    %v958 = vpop.f32.mrf.mxu0
    %v959 = vadd.f32 %v846, %v958
    %960 = vmatmul.f32.gmra.mxu0 %v897
    %v961 = vpop.f32.mrf.mxu0
    %v962 = vadd.f32 %v849, %v961
    %963 = vmatmul.f32.gmra.mxu0 %v900
    %v964 = vpop.f32.mrf.mxu0
    %v965 = vadd.f32 %v852, %v964
    %966 = vmatmul.f32.gmra.mxu0 %v903
    %v967 = vpop.f32.mrf.mxu0
    %v968 = vadd.f32 %v855, %v967
    %969 = vmatmul.f32.gmra.mxu0 %v906
    %v970 = vpop.f32.mrf.mxu0
    %v971 = vadd.f32 %v858, %v970
    %972 = vmatmul.f32.gmra.mxu0 %v909
    %v973 = vpop.f32.mrf.mxu0
    %v974 = vadd.f32 %v861, %v973
    %975 = vmatmul.f32.gmra.mxu0 %v912
    %v976 = vpop.f32.mrf.mxu0
    %v977 = vadd.f32 %v864, %v976
    %978 = vmatmul.f32.gmra.mxu0 %v915
    %v979 = vpop.f32.mrf.mxu0
    %v980 = vadd.f32 %v867, %v979
    %981 = vmatmul.f32.gmra.mxu0 %v918
    %v982 = vpop.f32.mrf.mxu0
    %v983 = vadd.f32 %v870, %v982
    %984 = vmatmul.f32.gmra.mxu0 %v921
    %v985 = vpop.f32.mrf.mxu0
    %v986 = vadd.f32 %v873, %v985
    %987 = vmatmul.f32.gmra.mxu0 %v924
    %v988 = vpop.f32.mrf.mxu0
    %v989 = vadd.f32 %v876, %v988
    %990 = vmatmul.f32.gmra.mxu0 %v927
    %v991 = vpop.f32.mrf.mxu0
    %v992 = vadd.f32 %v879, %v991
    %993 = vmatmul.f32.gmra.mxu0 %v930
    %v994 = vpop.f32.mrf.mxu0
    %v995 = vadd.f32 %v882, %v994
    %996 = vmatmul.f32.gmra.mxu0 %v933
    %v997 = vpop.f32.mrf.mxu0
    %v998 = vadd.f32 %v885, %v997
    %999 = vdwg.mxu0
    %v1000 = vld [vmem:[%s4] sm:$0x1]
    %v1002 = vperm.slane %v1000, 0
    %v1004 = vadd.f32 %v953, %v1002
    %v1005 = vadd.f32 %v956, %v1002
    %v1006 = vadd.f32 %v959, %v1002
    %v1007 = vadd.f32 %v962, %v1002
    %v1008 = vadd.f32 %v965, %v1002
    %v1009 = vadd.f32 %v968, %v1002
    %v1010 = vadd.f32 %v971, %v1002
    %v1011 = vadd.f32 %v974, %v1002
    %v1012 = vadd.f32 %v977, %v1002
    %v1013 = vadd.f32 %v980, %v1002
    %v1014 = vadd.f32 %v983, %v1002
    %v1015 = vadd.f32 %v986, %v1002
    %v1016 = vadd.f32 %v989, %v1002
    %v1017 = vadd.f32 %v992, %v1002
    %v1018 = vadd.f32 %v995, %v1002
    %v1019 = vadd.f32 %v998, %v1002
    %1020 = vst.msk [vmem:[%s5] sm:$0xff] %vm243, %v1004
    %1021 = vst.msk [vmem:[%s5 + $0x8] sm:$0xff] %vm243, %v1005
    %1022 = vst.msk [vmem:[%s5 + $0x10] sm:$0xff] %vm243, %v1006
    %1023 = vst.msk [vmem:[%s5 + $0x18] sm:$0xff] %vm243, %v1007
    %1024 = vst.msk [vmem:[%s5 + $0x20] sm:$0xff] %vm243, %v1008
    %1025 = vst.msk [vmem:[%s5 + $0x28] sm:$0xff] %vm243, %v1009
    %1026 = vst.msk [vmem:[%s5 + $0x30] sm:$0xff] %vm243, %v1010
    %1027 = vst.msk [vmem:[%s5 + $0x38] sm:$0xff] %vm243, %v1011
    %1028 = vst.msk [vmem:[%s5 + $0x40] sm:$0xff] %vm243, %v1012
    %1029 = vst.msk [vmem:[%s5 + $0x48] sm:$0xff] %vm243, %v1013
    %1030 = vst.msk [vmem:[%s5 + $0x50] sm:$0xff] %vm243, %v1014
    %1031 = vst.msk [vmem:[%s5 + $0x58] sm:$0xff] %vm243, %v1015
    %1032 = vst.msk [vmem:[%s5 + $0x60] sm:$0xff] %vm243, %v1016
    %1033 = vst.msk [vmem:[%s5 + $0x68] sm:$0xff] %vm243, %v1017
    %1034 = vst.msk [vmem:[%s5 + $0x70] sm:$0xff] %vm243, %v1018
    %1035 = vst.msk [vmem:[%s5 + $0x78] sm:$0xff] %vm243, %v1019
    // Predicated region
    $region98: #{tpu_custom_call.1} parent=1 // pred_check
      _
    $region99: #{tpu_custom_call.1} parent=1 // pred_check_branch
      %1037 = sbr.rel (0) target = $region101
    $region100: #{tpu_custom_call.1} parent=1 // pred_region
      _
    $region101: #{tpu_custom_call.1} parent=1 // pred_fallthru
      _
    // Predicated region
    $region102: #{tpu_custom_call.1} parent=1 // pred_check
      _
    $region103: #{tpu_custom_call.1} parent=1 // pred_check_branch
      %1039 = sbr.rel (0) target = $region105
    $region104: #{tpu_custom_call.1} parent=1 // pred_region
      _
    $region105: #{tpu_custom_call.1} parent=1 // pred_fallthru
      _

</llo_original>
